<compile_context>
chip_gen: v5e
topology: v5e:2x2
jax: 0.10.0
libtpu: 0.0.40
codegen_flags: <defaults>
</compile_context>

<pallas_src>
import functools

import jax
import jax.numpy as jnp
from jax.experimental import pallas as pl
from jax.experimental.pallas import tpu as pltpu

LANE = 128      # vreg lane width
SUBLANE = 8     # vreg sublane width (f32)


def _round_up(n, m):
    return (n + m - 1) // m * m


def mlp_kernel(x_ref, w1_ref, b1_ref, w2_ref, b2_ref, o_ref):
    # hidden = relu(x @ W1 + b1): f32 MXU accumulation, bias/ReLU on the VPU in f32.
    h = jnp.dot(x_ref[...], w1_ref[...], preferred_element_type=jnp.float32)
    h = jnp.maximum(h + b1_ref[...], 0.0)
    # out = hidden @ W2 + b2: narrow (O_pad = 8-lane) output tile -> 16x fewer
    # HBM writeback bytes than a 128-lane padded slab.
    o = jnp.dot(h.astype(w2_ref.dtype), w2_ref[...],
                preferred_element_type=jnp.float32)
    o_ref[...] = (o + b2_ref[...]).astype(o_ref.dtype)


@functools.partial(jax.jit, static_argnames=("n_output", "block_b"))
def cls_net_forward(x, padded_params, *, n_output, block_b=512):
    """x: (B, F) unpadded; padded_params from pad_params(). Returns (B, n_output).

    block_b must be a multiple of 8. For best v7x utilization pick block_b so
    that ceil(B / block_b) >= 2 (keeps both TensorCores busy).
    """
    w1p, b1p, w2p, b2p = padded_params
    B, F = x.shape
    assert w1p.shape[0] == F, "W1 first dim must match the feature dim of x"
    assert block_b % SUBLANE == 0
    H_pad = w1p.shape[1]
    O_pad = w2p.shape[1]

    x = x.astype(w1p.dtype)
    B_pad = _round_up(max(B, 1), block_b)
    if B_pad != B:
        # Pad batch rows only (feature dim stays unpadded). Padded rows produce
        # row-independent garbage logits that are sliced off below.
        x = jnp.pad(x, ((0, B_pad - B), (0, 0)))

    grid = (B_pad // block_b,)
    itemsize = jnp.dtype(w1p.dtype).itemsize
    cost = pl.CostEstimate(
        flops=2 * B_pad * (F * H_pad + H_pad * O_pad),
        transcendentals=0,
        bytes_accessed=(B_pad * F * itemsize                 # x read
                        + w1p.size * itemsize + b1p.size * 4  # resident params
                        + w2p.size * itemsize + b2p.size * 4
                        + B_pad * O_pad * 4),                 # output write
    )

    out_padded = pl.pallas_call(
        mlp_kernel,
        out_shape=jax.ShapeDtypeStruct((B_pad, O_pad), jnp.float32),
        grid_spec=pltpu.PrefetchScalarGridSpec(
            num_scalar_prefetch=0,
            grid=grid,
            in_specs=[
                pl.BlockSpec((block_b, F), lambda i: (i, 0)),    # x tile (pipelined)
                pl.BlockSpec((F, H_pad), lambda i: (0, 0)),      # W1 resident
                pl.BlockSpec((1, H_pad), lambda i: (0, 0)),      # b1 resident
                pl.BlockSpec((H_pad, O_pad), lambda i: (0, 0)),  # W2 resident
                pl.BlockSpec((1, O_pad), lambda i: (0, 0)),      # b2 resident
            ],
            out_specs=pl.BlockSpec((block_b, O_pad), lambda i: (i, 0)),
        ),
        compiler_params=pltpu.CompilerParams(
            dimension_semantics=("parallel",),  # megacore-shards batch on v7x
        ),
        cost_estimate=cost,
    )(x, w1p, b1p, w2p, b2p)

    return out_padded[:B, :n_output]


def init_params(key, n_feature, n_hidden, n_output):
    """PyTorch-Linear-like uniform init, weights stored as (in, out)."""
    k1, k2, k3, k4 = jax.random.split(key, 4)
    bound1 = 1.0 / jnp.sqrt(n_feature)
    bound2 = 1.0 / jnp.sqrt(n_hidden)
    w1 = jax.random.uniform(k1, (n_feature, n_hidden), jnp.float32, -bound1, bound1)
    b1 = jax.random.uniform(k2, (n_hidden,), jnp.float32, -bound1, bound1)
    w2 = jax.random.uniform(k3, (n_hidden, n_output), jnp.float32, -bound2, bound2)
    b2 = jax.random.uniform(k4, (n_output,), jnp.float32, -bound2, bound2)
    return w1, b1, w2, b2


def pad_params(w1, b1, w2, b2, compute_dtype=jnp.float32):
    """Zero-pad params ONCE.

    F stays unpadded (full-dim blocks are legal, MXU handles small K), the
    hidden dim is padded to 128 lanes (intermediate only, never hits HBM), and
    the output dim is padded only to 8 so the kernel's HBM writeback stays
    small. Zero padding is numerically neutral through the MLP.
    `compute_dtype=jnp.bfloat16` halves weight/x traffic on v6e/v7x (expect
    ~1e-2 relative error on logits; f32 accumulation is kept in-kernel).
    """
    F, H = w1.shape
    O = w2.shape[1]
    H_pad = _round_up(H, LANE)
    O_pad = _round_up(O, SUBLANE)
    w1p = jnp.zeros((F, H_pad), compute_dtype).at[:, :H].set(w1.astype(compute_dtype))
    b1p = jnp.zeros((1, H_pad), jnp.float32).at[0, :H].set(b1)
    w2p = jnp.zeros((H_pad, O_pad), compute_dtype).at[:H, :O].set(w2.astype(compute_dtype))
    b2p = jnp.zeros((1, O_pad), jnp.float32).at[0, :O].set(b2)
    return w1p, b1p, w2p, b2p


if __name__ == "__main__":
    key = jax.random.PRNGKey(0)
    kx0, kx1, kp = jax.random.split(key, 3)

    # Shapes from the reference script: feature_size=5, two clusters of 1000
    # samples at +/-2; n_hidden=32, n_output=2. block_b=512 -> grid of 4 steps
    # (exercises pipelining, megacore sharding, and the batch-tail pad path).
    data_size, n_feature, n_hidden, n_output = 1000, 5, 32, 2
    block_b = 512

    x0 = 2.0 + jax.random.normal(kx0, (data_size, n_feature), jnp.float32)
    x1 = -2.0 + jax.random.normal(kx1, (data_size, n_feature), jnp.float32)
    x = jnp.concatenate([x0, x1], axis=0)          # (2000, 5)

    w1, b1, w2, b2 = init_params(kp, n_feature, n_hidden, n_output)
    padded = pad_params(w1, b1, w2, b2)  # f32 so the check is tight;
                                         # pass compute_dtype=jnp.bfloat16 at scale.

    out = cls_net_forward(x, padded, n_output=n_output, block_b=block_b)
    out = jax.block_until_ready(out)

    # Pure-JAX reference (same semantics as the PyTorch forward).
    ref = jnp.maximum(x @ w1 + b1, 0.0) @ w2 + b2
    assert out.shape == (2 * data_size, n_output)
    max_err = float(jnp.max(jnp.abs(out - ref)))
    assert jnp.allclose(out, ref, atol=1e-5, rtol=1e-5), max_err

    print("KERNEL_OK")
</pallas_src>

<mosaic_0001>
module attributes {stable_mosaic.version = 11 : i64} {
  func.func @mlp_kernel(%arg0: i32, %arg1: memref<512x5xf32, #tpu.memory_space<vmem>>, %arg2: memref<5x128xf32, #tpu.memory_space<vmem>>, %arg3: memref<1x128xf32, #tpu.memory_space<vmem>>, %arg4: memref<128x8xf32, #tpu.memory_space<vmem>>, %arg5: memref<1x8xf32, #tpu.memory_space<vmem>>, %arg6: memref<512x8xf32, #tpu.memory_space<vmem>>) attributes {dimension_semantics = [#tpu.dimension_semantics<parallel>], iteration_bounds = array<i64: 4>, scalar_prefetch = 0 : i64, scratch_operands = 0 : i64, tpu.core_type = #tpu.core_type<tc>, window_params = [{transform_indices = @transform_0, window_bounds = array<i64: 512, 5>}, {pipeline_mode = #tpu.pipeline_mode<synchronous>, transform_indices = @transform_1, window_bounds = array<i64: 5, 128>}, {pipeline_mode = #tpu.pipeline_mode<synchronous>, transform_indices = @transform_2, window_bounds = array<i64: 1, 128>}, {pipeline_mode = #tpu.pipeline_mode<synchronous>, transform_indices = @transform_3, window_bounds = array<i64: 128, 8>}, {pipeline_mode = #tpu.pipeline_mode<synchronous>, transform_indices = @transform_4, window_bounds = array<i64: 1, 8>}, {transform_indices = @transform_5, window_bounds = array<i64: 512, 8>}]} {
    %c0 = arith.constant 0 : index
    %c0_0 = arith.constant 0 : index
    %0 = vector.load %arg1[%c0, %c0_0] : memref<512x5xf32, #tpu.memory_space<vmem>>, vector<512x5xf32>
    %c0_1 = arith.constant 0 : index
    %c0_2 = arith.constant 0 : index
    %1 = vector.load %arg2[%c0_1, %c0_2] : memref<5x128xf32, #tpu.memory_space<vmem>>, vector<5x128xf32>
    %cst = arith.constant dense<0.000000e+00> : vector<512x128xf32>
    %2 = tpu.matmul %0, %1, %cst {dimension_numbers = #tpu.dot_dimension_numbers<[1], [0], [0], [1], [0, 0, 1, 1], [], []>} : vector<512x5xf32>, vector<5x128xf32>, vector<512x128xf32> -> vector<512x128xf32>
    %c0_3 = arith.constant 0 : index
    %c0_4 = arith.constant 0 : index
    %3 = vector.load %arg3[%c0_3, %c0_4] : memref<1x128xf32, #tpu.memory_space<vmem>>, vector<1x128xf32>
    %4 = vector.broadcast %3 : vector<1x128xf32> to vector<512x128xf32>
    %5 = arith.addf %2, %4 : vector<512x128xf32>
    %cst_5 = arith.constant 0.000000e+00 : f32
    %6 = vector.broadcast %cst_5 : f32 to vector<512x128xf32>
    %7 = arith.maximumf %5, %6 : vector<512x128xf32>
    %c0_6 = arith.constant 0 : index
    %c0_7 = arith.constant 0 : index
    %8 = vector.load %arg4[%c0_6, %c0_7] : memref<128x8xf32, #tpu.memory_space<vmem>>, vector<128x8xf32>
    %cst_8 = arith.constant dense<0.000000e+00> : vector<512x8xf32>
    %9 = tpu.matmul %7, %8, %cst_8 {dimension_numbers = #tpu.dot_dimension_numbers<[1], [0], [0], [1], [0, 0, 1, 1], [], []>} : vector<512x128xf32>, vector<128x8xf32>, vector<512x8xf32> -> vector<512x8xf32>
    %c0_9 = arith.constant 0 : index
    %c0_10 = arith.constant 0 : index
    %10 = vector.load %arg5[%c0_9, %c0_10] : memref<1x8xf32, #tpu.memory_space<vmem>>, vector<1x8xf32>
    %11 = vector.broadcast %10 : vector<1x8xf32> to vector<512x8xf32>
    %12 = arith.addf %9, %11 : vector<512x8xf32>
    %c0_11 = arith.constant 0 : index
    %c0_12 = arith.constant 0 : index
    %13 = vector.load %arg6[%c0_11, %c0_12] : memref<512x8xf32, #tpu.memory_space<vmem>>, vector<512x8xf32>
    tpu.vector_store %arg6[%c0_11, %c0_12], %12 {strides = array<i32>} : memref<512x8xf32, #tpu.memory_space<vmem>>, vector<512x8xf32>,
    return
  }
  func.func @transform_0(%arg0: i32) -> (i32, i32) {
    %c0_i32 = arith.constant 0 : i32
    %c0_i32_0 = arith.constant 0 : i32
    return %arg0, %c0_i32 : i32, i32
  }
  func.func @transform_1(%arg0: i32) -> (i32, i32) {
    %c0_i32 = arith.constant 0 : i32
    %c0_i32_0 = arith.constant 0 : i32
    %c0_i32_1 = arith.constant 0 : i32
    return %c0_i32, %c0_i32_0 : i32, i32
  }
  func.func @transform_2(%arg0: i32) -> (i32, i32) {
    %c0_i32 = arith.constant 0 : i32
    %c0_i32_0 = arith.constant 0 : i32
    %c0_i32_1 = arith.constant 0 : i32
    return %c0_i32, %c0_i32_0 : i32, i32
  }
  func.func @transform_3(%arg0: i32) -> (i32, i32) {
    %c0_i32 = arith.constant 0 : i32
    %c0_i32_0 = arith.constant 0 : i32
    %c0_i32_1 = arith.constant 0 : i32
    return %c0_i32, %c0_i32_0 : i32, i32
  }
  func.func @transform_4(%arg0: i32) -> (i32, i32) {
    %c0_i32 = arith.constant 0 : i32
    %c0_i32_0 = arith.constant 0 : i32
    %c0_i32_1 = arith.constant 0 : i32
    return %c0_i32, %c0_i32_0 : i32, i32
  }
  func.func @transform_5(%arg0: i32) -> (i32, i32) {
    %c0_i32 = arith.constant 0 : i32
    %c0_i32_0 = arith.constant 0 : i32
    return %arg0, %c0_i32 : i32, i32
  }
}

</mosaic_0001>

<llo_original>
// kernel: cls_net_forward.1
$region0: #{cls_net_forward.1}
  #allocation0 [shape = 'u32[]', space=smem, size = 0x4, offset = 0x4, fixed_abs, tag = 'smem constant byte address 0x4 - core index']
  #allocation1 [shape = 'u32[72,128]{1,0:T(1,128)}', space=vmem, size = 0x9000, scoped, tag = 'internal scratch']
  %s0 = inlined_call_operand.vmem [shape: f32[2048,5], index: 0, kind: input, shape index: {}]
  %s1 = inlined_call_operand.vmem [shape: f32[5,128], index: 1, kind: input, shape index: {}]
  %s2 = inlined_call_operand.vmem [shape: f32[1,128], index: 2, kind: input, shape index: {}]
  %s3 = inlined_call_operand.vmem [shape: f32[128,8], index: 3, kind: input, shape index: {}]
  %s4 = inlined_call_operand.vmem [shape: f32[1,8], index: 4, kind: input, shape index: {}]
  %s5 = inlined_call_operand.vmem [shape: f32[2048,8], index: 5, kind: output, shape index: {}]
  %s6 = sld [smem:[#allocation0]]
  $region53: #{cls_net_forward.1} parent=0
    _
  %s8 = ssub.s32 1, %s6
  %s9 = scalar_select 0, %s8, %s6
  loop: start=0, step=1, limit=6
  $region2: #{cls_net_forward.1} parent=0 // loop_pre_header
    _
  $region3: #{cls_net_forward.1} parent=0 // loop_header
    %s11 = sphi 0, %s15
    %p12 = scmp.ge.s32.totalorder %s11, 6
    %s21 = sphi 0, %s23
    %s24 = sphi 0, %s21
    %s25 = sphi 0, %s24
    %s41 = sphi 0, %s25
    %s45 = sphi 0, %s45
    %s47 = sphi 0, %s45
    %s48 = sphi 0, %s47
    %s62 = sphi 0, %s48
    %s66 = sphi 0, %s66
    %s68 = sphi 0, %s66
    %s69 = sphi 0, %s68
    %s83 = sphi 0, %s69
    %s87 = sphi 0, %s87
    %s89 = sphi 0, %s87
    %s90 = sphi 0, %s89
    %s104 = sphi 0, %s90
    %s108 = sphi 0, %s108
    %s110 = sphi 0, %s108
    %s111 = sphi 0, %s110
    %s125 = sphi 0, %s111
    %s131 = sphi 0, %s133
    %s134 = sphi 0, %s131
    %s135 = sphi 0, %s134
    %s151 = sphi 0, %s135
  $region4: #{cls_net_forward.1} parent=0 // loop_header_branch
    %14 = sbr.rel (%p12) target = $region8
  $region5: #{cls_net_forward.1} parent=0 // loop_body
    %s16 = ssub.s32 %s11, 1
    %s17 = ssub.s32 %s11, 2
    %s18 = sadd.s32 %s11, 1
    %s19 = ssub.s32 %s11, %s18
    %p20 = scmp.eq.s32.totalorder %s19, 0
    %s22 = sadd.s32 %s21, 1
    %s23 = scalar_select %p20, %s21, %s22
    %p26 = pneg %p20
    %p27 = scmp.eq.s32.totalorder %s11, 3
    %p28 = por %p26, %p27
    %p29 = scmp.ne.s32.totalorder %s21, %s24
    %p30 = scmp.eq.s32.totalorder %s11, 0
    %p31 = por %p29, %p30
    %p32 = scmp.ne.s32.totalorder %s21, %s24
    %p33 = scmp.eq.s32.totalorder %s16, 3
    %p34 = por %p32, %p33
    %p35 = scmp.ne.s32.totalorder %s24, %s25
    %p36 = scmp.eq.s32.totalorder %s16, 0
    %p37 = por %p35, %p36
    %p38 = scmp.ne.s32.totalorder %s24, %s25
    %p39 = scmp.eq.s32.totalorder %s17, 3
    %p40 = por %p38, %p39
    %p42 = scmp.ne.s32.totalorder %s25, %s41
    %p43 = scmp.eq.s32.totalorder %s17, 0
    %p44 = por %p42, %p43
    %s46 = sadd.s32 %s45, 1
    %p49 = scmp.eq.s32.totalorder %s11, 3
    %p50 = scmp.ne.s32.totalorder %s45, %s47
    %p51 = scmp.eq.s32.totalorder %s11, 0
    %p52 = por %p50, %p51
    %p53 = scmp.ne.s32.totalorder %s45, %s47
    %p54 = scmp.eq.s32.totalorder %s16, 3
    %p55 = por %p53, %p54
    %p56 = scmp.ne.s32.totalorder %s47, %s48
    %p57 = scmp.eq.s32.totalorder %s16, 0
    %p58 = por %p56, %p57
    %p59 = scmp.ne.s32.totalorder %s47, %s48
    %p60 = scmp.eq.s32.totalorder %s17, 3
    %p61 = por %p59, %p60
    %p63 = scmp.ne.s32.totalorder %s48, %s62
    %p64 = scmp.eq.s32.totalorder %s17, 0
    %p65 = por %p63, %p64
    %s67 = sadd.s32 %s66, 1
    %p70 = scmp.eq.s32.totalorder %s11, 3
    %p71 = scmp.ne.s32.totalorder %s66, %s68
    %p72 = scmp.eq.s32.totalorder %s11, 0
    %p73 = por %p71, %p72
    %p74 = scmp.ne.s32.totalorder %s66, %s68
    %p75 = scmp.eq.s32.totalorder %s16, 3
    %p76 = por %p74, %p75
    %p77 = scmp.ne.s32.totalorder %s68, %s69
    %p78 = scmp.eq.s32.totalorder %s16, 0
    %p79 = por %p77, %p78
    %p80 = scmp.ne.s32.totalorder %s68, %s69
    %p81 = scmp.eq.s32.totalorder %s17, 3
    %p82 = por %p80, %p81
    %p84 = scmp.ne.s32.totalorder %s69, %s83
    %p85 = scmp.eq.s32.totalorder %s17, 0
    %p86 = por %p84, %p85
    %s88 = sadd.s32 %s87, 1
    %p91 = scmp.eq.s32.totalorder %s11, 3
    %p92 = scmp.ne.s32.totalorder %s87, %s89
    %p93 = scmp.eq.s32.totalorder %s11, 0
    %p94 = por %p92, %p93
    %p95 = scmp.ne.s32.totalorder %s87, %s89
    %p96 = scmp.eq.s32.totalorder %s16, 3
    %p97 = por %p95, %p96
    %p98 = scmp.ne.s32.totalorder %s89, %s90
    %p99 = scmp.eq.s32.totalorder %s16, 0
    %p100 = por %p98, %p99
    %p101 = scmp.ne.s32.totalorder %s89, %s90
    %p102 = scmp.eq.s32.totalorder %s17, 3
    %p103 = por %p101, %p102
    %p105 = scmp.ne.s32.totalorder %s90, %s104
    %p106 = scmp.eq.s32.totalorder %s17, 0
    %p107 = por %p105, %p106
    %s109 = sadd.s32 %s108, 1
    %p112 = scmp.eq.s32.totalorder %s11, 3
    %p113 = scmp.ne.s32.totalorder %s108, %s110
    %p114 = scmp.eq.s32.totalorder %s11, 0
    %p115 = por %p113, %p114
    %p116 = scmp.ne.s32.totalorder %s108, %s110
    %p117 = scmp.eq.s32.totalorder %s16, 3
    %p118 = por %p116, %p117
    %p119 = scmp.ne.s32.totalorder %s110, %s111
    %p120 = scmp.eq.s32.totalorder %s16, 0
    %p121 = por %p119, %p120
    %p122 = scmp.ne.s32.totalorder %s110, %s111
    %p123 = scmp.eq.s32.totalorder %s17, 3
    %p124 = por %p122, %p123
    %p126 = scmp.ne.s32.totalorder %s111, %s125
    %p127 = scmp.eq.s32.totalorder %s17, 0
    %p128 = por %p126, %p127
    %s129 = ssub.s32 %s11, %s18
    %p130 = scmp.eq.s32.totalorder %s129, 0
    %s132 = sadd.s32 %s131, 1
    %s133 = scalar_select %p130, %s131, %s132
    %p136 = pneg %p130
    %p137 = scmp.eq.s32.totalorder %s11, 3
    %p138 = por %p136, %p137
    %p139 = scmp.ne.s32.totalorder %s131, %s134
    %p140 = scmp.eq.s32.totalorder %s11, 0
    %p141 = por %p139, %p140
    %p142 = scmp.ne.s32.totalorder %s131, %s134
    %p143 = scmp.eq.s32.totalorder %s16, 3
    %p144 = por %p142, %p143
    %p145 = scmp.ne.s32.totalorder %s134, %s135
    %p146 = scmp.eq.s32.totalorder %s16, 0
    %p147 = por %p145, %p146
    %p148 = scmp.ne.s32.totalorder %s134, %s135
    %p149 = scmp.eq.s32.totalorder %s17, 3
    %p150 = por %p148, %p149
    %p152 = scmp.ne.s32.totalorder %s135, %s151
    %p153 = scmp.eq.s32.totalorder %s17, 0
    %p154 = por %p152, %p153
    %p155 = scmp.le.s32.totalorder 1, %s11
    %p156 = scmp.lt.s32.totalorder %s11, 5
    %p157 = pnand %p155, %p156
    %p158 = pneg %p157
    // Predicated region
    $region9: #{cls_net_forward.1} parent=5 // pred_check
      _
    $region10: #{cls_net_forward.1} parent=5 // pred_check_branch
      %160 = sbr.rel (%p157) target = $region12
    $region11: #{cls_net_forward.1} parent=5 // pred_region
      %s161 = ssub.s32 %s11, 1
      // Predicated region
      $region13: #{cls_net_forward.1} parent=11 // pred_check
        %p162 = pneg %p58
      $region14: #{cls_net_forward.1} parent=11 // pred_check_branch
        %164 = sbr.rel (%p162) target = $region16
      $region15: #{cls_net_forward.1} parent=11 // pred_region
        _
      $region16: #{cls_net_forward.1} parent=11 // pred_fallthru
        _
      // Predicated region
      $region17: #{cls_net_forward.1} parent=11 // pred_check
        %p165 = pneg %p79
      $region18: #{cls_net_forward.1} parent=11 // pred_check_branch
        %167 = sbr.rel (%p165) target = $region20
      $region19: #{cls_net_forward.1} parent=11 // pred_region
        _
      $region20: #{cls_net_forward.1} parent=11 // pred_fallthru
        _
      // Predicated region
      $region21: #{cls_net_forward.1} parent=11 // pred_check
        %p168 = pneg %p100
      $region22: #{cls_net_forward.1} parent=11 // pred_check_branch
        %170 = sbr.rel (%p168) target = $region24
      $region23: #{cls_net_forward.1} parent=11 // pred_region
        _
      $region24: #{cls_net_forward.1} parent=11 // pred_fallthru
        _
      // Predicated region
      $region25: #{cls_net_forward.1} parent=11 // pred_check
        %p171 = pneg %p121
      $region26: #{cls_net_forward.1} parent=11 // pred_check_branch
        %173 = sbr.rel (%p171) target = $region28
      $region27: #{cls_net_forward.1} parent=11 // pred_region
        _
      $region28: #{cls_net_forward.1} parent=11 // pred_fallthru
        _
    $region12: #{cls_net_forward.1} parent=5 // pred_fallthru
      _
    %p174 = scmp.lt.s32.totalorder %s11, 4
    // Predicated region
    $region29: #{cls_net_forward.1} parent=5 // pred_check
      %p175 = pneg %p174
    $region30: #{cls_net_forward.1} parent=5 // pred_check_branch
      %177 = sbr.rel (%p175) target = $region32
    $region31: #{cls_net_forward.1} parent=5 // pred_region
      // Predicated region
      $region33: #{cls_net_forward.1} parent=31 // pred_check
        %p178 = pneg %p31
      $region34: #{cls_net_forward.1} parent=31 // pred_check_branch
        %180 = sbr.rel (%p178) target = $region36
      $region35: #{cls_net_forward.1} parent=31 // pred_region
        %s181 = smul.u32 64, %s11
        %p182 = scmp.lt.s32.totalorder %s181, 255
        %s183 = scalar_select %p182, %s181, 255
        %s184 = smul.addr %s183, 8
        %s185 = scalar_lea.vmem %s0, %s184
        %s186 = smul.u32 64, %s11
      $region36: #{cls_net_forward.1} parent=31 // pred_fallthru
        _
    $region32: #{cls_net_forward.1} parent=5 // pred_fallthru
      _
    %p187 = scmp.le.s32.totalorder 1, %s11
    %p188 = scmp.lt.s32.totalorder %s11, 5
    %p189 = pnand %p187, %p188
    %p190 = pneg %p189
    // Predicated region
    $region37: #{cls_net_forward.1} parent=5 // pred_check
      _
    $region38: #{cls_net_forward.1} parent=5 // pred_check_branch
      %192 = sbr.rel (%p189) target = $region40
    $region39: #{cls_net_forward.1} parent=5 // pred_region
      %s193 = ssub.s32 %s11, 1
      %s194 = smul.u32 64, %s16
      %p195 = scmp.lt.s32.totalorder %s194, 255
      %s196 = scalar_select %p195, %s194, 255
      %s197 = smul.addr %s196, 8
      %s198 = scalar_lea.vmem %s0, %s197
      %p199 = pneg %p37
      %p200 = pneg %p34
      %p201 = pneg %p58
      %p202 = pneg %p55
      %p203 = pneg %p79
      %p204 = pneg %p76
      %p205 = pneg %p100
      %p206 = pneg %p97
      %p207 = pneg %p121
      %p208 = pneg %p118
      %p209 = pneg %p147
      %p210 = pneg %p144
      %s211 = smul.u32 64, %s16
      %p212 = scmp.lt.s32.totalorder %s211, 255
      %s213 = scalar_select %p212, %s211, 255
      %s214 = smul.addr %s213, 8
      %s215 = scalar_lea.vmem %s5, %s214
      %s216 = smul.u32 64, %s16
      %p217 = scmp.lt.s32.totalorder %s216, 255
      %s218 = scalar_select %p217, %s216, 255
      %s219 = smul.addr %s218, 8
      %s220 = scalar_lea.vmem %s0, %s219
      %s221 = smul.u32 64, %s16
      %s222 = smul.u32 64, %s16
      %p223 = scmp.lt.s32.totalorder %s222, 255
      %s224 = scalar_select %p223, %s222, 255
      %s225 = smul.addr %s224, 8
      %s226 = scalar_lea.vmem %s5, %s225
      %s227 = smul.u32 64, %s16
      %v228 = vld [vmem:[%s220] sm:$0xff]
      %v229 = vld [vmem:[%s220 + $0x8] sm:$0xff]
      %v230 = vld [vmem:[%s220 + $0x10] sm:$0xff]
      %v231 = vld [vmem:[%s220 + $0x18] sm:$0xff]
      %v232 = vld [vmem:[%s220 + $0x20] sm:$0xff]
      %v233 = vld [vmem:[%s220 + $0x28] sm:$0xff]
      %v234 = vld [vmem:[%s220 + $0x30] sm:$0xff]
      %v235 = vld [vmem:[%s220 + $0x38] sm:$0xff]
      %v236 = vld [vmem:[%s220 + $0x40] sm:$0xff]
      %v237 = vld [vmem:[%s220 + $0x48] sm:$0xff]
      %v238 = vld [vmem:[%s220 + $0x50] sm:$0xff]
      %v239 = vld [vmem:[%s220 + $0x58] sm:$0xff]
      %v240 = vld [vmem:[%s220 + $0x60] sm:$0xff]
      %v241 = vld [vmem:[%s220 + $0x68] sm:$0xff]
      %v242 = vld [vmem:[%s220 + $0x70] sm:$0xff]
      %v243 = vld [vmem:[%s220 + $0x78] sm:$0xff]
      %v244 = vld [vmem:[%s220 + $0x80] sm:$0xff]
      %v245 = vld [vmem:[%s220 + $0x88] sm:$0xff]
      %v246 = vld [vmem:[%s220 + $0x90] sm:$0xff]
      %v247 = vld [vmem:[%s220 + $0x98] sm:$0xff]
      %v248 = vld [vmem:[%s220 + $0xa0] sm:$0xff]
      %v249 = vld [vmem:[%s220 + $0xa8] sm:$0xff]
      %v250 = vld [vmem:[%s220 + $0xb0] sm:$0xff]
      %v251 = vld [vmem:[%s220 + $0xb8] sm:$0xff]
      %v252 = vld [vmem:[%s220 + $0xc0] sm:$0xff]
      %v253 = vld [vmem:[%s220 + $0xc8] sm:$0xff]
      %v254 = vld [vmem:[%s220 + $0xd0] sm:$0xff]
      %v255 = vld [vmem:[%s220 + $0xd8] sm:$0xff]
      %v256 = vld [vmem:[%s220 + $0xe0] sm:$0xff]
      %v257 = vld [vmem:[%s220 + $0xe8] sm:$0xff]
      %v258 = vld [vmem:[%s220 + $0xf0] sm:$0xff]
      %v259 = vld [vmem:[%s220 + $0xf8] sm:$0xff]
      %v260 = vld [vmem:[%s220 + $0x100] sm:$0xff]
      %v261 = vld [vmem:[%s220 + $0x108] sm:$0xff]
      %v262 = vld [vmem:[%s220 + $0x110] sm:$0xff]
      %v263 = vld [vmem:[%s220 + $0x118] sm:$0xff]
      %v264 = vld [vmem:[%s220 + $0x120] sm:$0xff]
      %v265 = vld [vmem:[%s220 + $0x128] sm:$0xff]
      %v266 = vld [vmem:[%s220 + $0x130] sm:$0xff]
      %v267 = vld [vmem:[%s220 + $0x138] sm:$0xff]
      %v268 = vld [vmem:[%s220 + $0x140] sm:$0xff]
      %v269 = vld [vmem:[%s220 + $0x148] sm:$0xff]
      %v270 = vld [vmem:[%s220 + $0x150] sm:$0xff]
      %v271 = vld [vmem:[%s220 + $0x158] sm:$0xff]
      %v272 = vld [vmem:[%s220 + $0x160] sm:$0xff]
      %v273 = vld [vmem:[%s220 + $0x168] sm:$0xff]
      %v274 = vld [vmem:[%s220 + $0x170] sm:$0xff]
      %v275 = vld [vmem:[%s220 + $0x178] sm:$0xff]
      %v276 = vld [vmem:[%s220 + $0x180] sm:$0xff]
      %v277 = vld [vmem:[%s220 + $0x188] sm:$0xff]
      %v278 = vld [vmem:[%s220 + $0x190] sm:$0xff]
      %v279 = vld [vmem:[%s220 + $0x198] sm:$0xff]
      %v280 = vld [vmem:[%s220 + $0x1a0] sm:$0xff]
      %v281 = vld [vmem:[%s220 + $0x1a8] sm:$0xff]
      %v282 = vld [vmem:[%s220 + $0x1b0] sm:$0xff]
      %v283 = vld [vmem:[%s220 + $0x1b8] sm:$0xff]
      %v284 = vld [vmem:[%s220 + $0x1c0] sm:$0xff]
      %v285 = vld [vmem:[%s220 + $0x1c8] sm:$0xff]
      %v286 = vld [vmem:[%s220 + $0x1d0] sm:$0xff]
      %v287 = vld [vmem:[%s220 + $0x1d8] sm:$0xff]
      %v288 = vld [vmem:[%s220 + $0x1e0] sm:$0xff]
      %v289 = vld [vmem:[%s220 + $0x1e8] sm:$0xff]
      %v290 = vld [vmem:[%s220 + $0x1f0] sm:$0xff]
      %v291 = vld [vmem:[%s220 + $0x1f8] sm:$0xff]
      %v292 = vld [vmem:[%s1] sm:$0x1f]
      %v293 = vld [vmem:[%s2] sm:$0x1]
      %v295 = vperm.slane %v293, 0
      %vm297 = vcmask 39936
      %v299 = vsel %vm297, %v228, 0
      %v302 = vsel %vm297, %v229, 0
      %v305 = vsel %vm297, %v230, 0
      %v308 = vsel %vm297, %v231, 0
      %v311 = vsel %vm297, %v232, 0
      %v314 = vsel %vm297, %v233, 0
      %v317 = vsel %vm297, %v234, 0
      %v320 = vsel %vm297, %v235, 0
      %v323 = vsel %vm297, %v236, 0
      %v326 = vsel %vm297, %v237, 0
      %v329 = vsel %vm297, %v238, 0
      %v332 = vsel %vm297, %v239, 0
      %v335 = vsel %vm297, %v240, 0
      %v338 = vsel %vm297, %v241, 0
      %v341 = vsel %vm297, %v242, 0
      %v344 = vsel %vm297, %v243, 0
      %v347 = vsel %vm297, %v244, 0
      %v350 = vsel %vm297, %v245, 0
      %v353 = vsel %vm297, %v246, 0
      %v356 = vsel %vm297, %v247, 0
      %v359 = vsel %vm297, %v248, 0
      %v362 = vsel %vm297, %v249, 0
      %v365 = vsel %vm297, %v250, 0
      %v368 = vsel %vm297, %v251, 0
      %v371 = vsel %vm297, %v252, 0
      %v374 = vsel %vm297, %v253, 0
      %v377 = vsel %vm297, %v254, 0
      %v380 = vsel %vm297, %v255, 0
      %v383 = vsel %vm297, %v256, 0
      %v386 = vsel %vm297, %v257, 0
      %v389 = vsel %vm297, %v258, 0
      %v392 = vsel %vm297, %v259, 0
      %v395 = vsel %vm297, %v260, 0
      %v398 = vsel %vm297, %v261, 0
      %v401 = vsel %vm297, %v262, 0
      %v404 = vsel %vm297, %v263, 0
      %v407 = vsel %vm297, %v264, 0
      %v410 = vsel %vm297, %v265, 0
      %v413 = vsel %vm297, %v266, 0
      %v416 = vsel %vm297, %v267, 0
      %v419 = vsel %vm297, %v268, 0
      %v422 = vsel %vm297, %v269, 0
      %v425 = vsel %vm297, %v270, 0
      %v428 = vsel %vm297, %v271, 0
      %v431 = vsel %vm297, %v272, 0
      %v434 = vsel %vm297, %v273, 0
      %v437 = vsel %vm297, %v274, 0
      %v440 = vsel %vm297, %v275, 0
      %v443 = vsel %vm297, %v276, 0
      %v446 = vsel %vm297, %v277, 0
      %v449 = vsel %vm297, %v278, 0
      %v452 = vsel %vm297, %v279, 0
      %v455 = vsel %vm297, %v280, 0
      %v458 = vsel %vm297, %v281, 0
      %v461 = vsel %vm297, %v282, 0
      %v464 = vsel %vm297, %v283, 0
      %v467 = vsel %vm297, %v284, 0
      %v470 = vsel %vm297, %v285, 0
      %v473 = vsel %vm297, %v286, 0
      %v476 = vsel %vm297, %v287, 0
      %v479 = vsel %vm297, %v288, 0
      %v482 = vsel %vm297, %v289, 0
      %v485 = vsel %vm297, %v290, 0
      %v488 = vsel %vm297, %v291, 0
      %vm490 = vcmask 1044480
      %v492 = vsel %vm490, %v292, 0
      %494 = vmatpush.msra.mxu0 0.0
      %495 = vmatpush.msra.mxu0 0.0
      %496 = vmatpush.msra.mxu0 0.0
      %497 = vmatpush.msra.mxu0 0.0
      %498 = vmatpush.msra.mxu0 0.0
      %499 = vmatpush.msra.mxu0 0.0
      %500 = vmatpush.msra.mxu0 0.0
      %501 = vmatpush.msra.mxu0 0.0
      %502 = vmatpush.msra.mxu0 0.0
      %503 = vmatpush.msra.mxu0 0.0
      %504 = vmatpush.msra.mxu0 0.0
      %505 = vmatpush.msra.mxu0 0.0
      %506 = vmatpush.msra.mxu0 0.0
      %507 = vmatpush.msra.mxu0 0.0
      %508 = vmatpush.msra.mxu0 0.0
      %509 = vmatpush.msra.mxu0 %v492
      %510 = vmatmul.f32.gmra.mxu0 %v299
      %v511 = vpop.f32.mrf.mxu0
      %v512 = vadd.f32 %v295, %v511
      %513 = vmatmul.f32.gmra.mxu0 %v302
      %v514 = vpop.f32.mrf.mxu0
      %v515 = vadd.f32 %v295, %v514
      %516 = vmatmul.f32.gmra.mxu0 %v305
      %v517 = vpop.f32.mrf.mxu0
      %v518 = vadd.f32 %v295, %v517
      %519 = vmatmul.f32.gmra.mxu0 %v308
      %v520 = vpop.f32.mrf.mxu0
      %v521 = vadd.f32 %v295, %v520
      %522 = vmatmul.f32.gmra.mxu0 %v311
      %v523 = vpop.f32.mrf.mxu0
      %v524 = vadd.f32 %v295, %v523
      %525 = vmatmul.f32.gmra.mxu0 %v314
      %v526 = vpop.f32.mrf.mxu0
      %v527 = vadd.f32 %v295, %v526
      %528 = vmatmul.f32.gmra.mxu0 %v317
      %v529 = vpop.f32.mrf.mxu0
      %v530 = vadd.f32 %v295, %v529
      %531 = vmatmul.f32.gmra.mxu0 %v320
      %v532 = vpop.f32.mrf.mxu0
      %v533 = vadd.f32 %v295, %v532
      %534 = vmatmul.f32.gmra.mxu0 %v323
      %v535 = vpop.f32.mrf.mxu0
      %v536 = vadd.f32 %v295, %v535
      %537 = vmatmul.f32.gmra.mxu0 %v326
      %v538 = vpop.f32.mrf.mxu0
      %v539 = vadd.f32 %v295, %v538
      %540 = vmatmul.f32.gmra.mxu0 %v329
      %v541 = vpop.f32.mrf.mxu0
      %v542 = vadd.f32 %v295, %v541
      %543 = vmatmul.f32.gmra.mxu0 %v332
      %v544 = vpop.f32.mrf.mxu0
      %v545 = vadd.f32 %v295, %v544
      %546 = vmatmul.f32.gmra.mxu0 %v335
      %v547 = vpop.f32.mrf.mxu0
      %v548 = vadd.f32 %v295, %v547
      %549 = vmatmul.f32.gmra.mxu0 %v338
      %v550 = vpop.f32.mrf.mxu0
      %v551 = vadd.f32 %v295, %v550
      %552 = vmatmul.f32.gmra.mxu0 %v341
      %v553 = vpop.f32.mrf.mxu0
      %v554 = vadd.f32 %v295, %v553
      %555 = vmatmul.f32.gmra.mxu0 %v344
      %v556 = vpop.f32.mrf.mxu0
      %v557 = vadd.f32 %v295, %v556
      %558 = vmatmul.f32.gmra.mxu0 %v347
      %v559 = vpop.f32.mrf.mxu0
      %v560 = vadd.f32 %v295, %v559
      %561 = vmatmul.f32.gmra.mxu0 %v350
      %v562 = vpop.f32.mrf.mxu0
      %v563 = vadd.f32 %v295, %v562
      %564 = vmatmul.f32.gmra.mxu0 %v353
      %v565 = vpop.f32.mrf.mxu0
      %v566 = vadd.f32 %v295, %v565
      %567 = vmatmul.f32.gmra.mxu0 %v356
      %v568 = vpop.f32.mrf.mxu0
      %v569 = vadd.f32 %v295, %v568
      %570 = vmatmul.f32.gmra.mxu0 %v359
      %v571 = vpop.f32.mrf.mxu0
      %v572 = vadd.f32 %v295, %v571
      %573 = vmatmul.f32.gmra.mxu0 %v362
      %v574 = vpop.f32.mrf.mxu0
      %v575 = vadd.f32 %v295, %v574
      %576 = vmatmul.f32.gmra.mxu0 %v365
      %v577 = vpop.f32.mrf.mxu0
      %v578 = vadd.f32 %v295, %v577
      %579 = vmatmul.f32.gmra.mxu0 %v368
      %v580 = vpop.f32.mrf.mxu0
      %v581 = vadd.f32 %v295, %v580
      %582 = vmatmul.f32.gmra.mxu0 %v371
      %v583 = vpop.f32.mrf.mxu0
      %v584 = vadd.f32 %v295, %v583
      %585 = vmatmul.f32.gmra.mxu0 %v374
      %v586 = vpop.f32.mrf.mxu0
      %v587 = vadd.f32 %v295, %v586
      %588 = vmatmul.f32.gmra.mxu0 %v377
      %v589 = vpop.f32.mrf.mxu0
      %v590 = vadd.f32 %v295, %v589
      %591 = vmatmul.f32.gmra.mxu0 %v380
      %v592 = vpop.f32.mrf.mxu0
      %v593 = vadd.f32 %v295, %v592
      %594 = vmatmul.f32.gmra.mxu0 %v383
      %v595 = vpop.f32.mrf.mxu0
      %v596 = vadd.f32 %v295, %v595
      %597 = vmatmul.f32.gmra.mxu0 %v386
      %v598 = vpop.f32.mrf.mxu0
      %v599 = vadd.f32 %v295, %v598
      %600 = vmatmul.f32.gmra.mxu0 %v389
      %v601 = vpop.f32.mrf.mxu0
      %v602 = vadd.f32 %v295, %v601
      %603 = vmatmul.f32.gmra.mxu0 %v392
      %v604 = vpop.f32.mrf.mxu0
      %v605 = vadd.f32 %v295, %v604
      %606 = vmatmul.f32.gmra.mxu0 %v395
      %v607 = vpop.f32.mrf.mxu0
      %v608 = vadd.f32 %v295, %v607
      %609 = vmatmul.f32.gmra.mxu0 %v398
      %v610 = vpop.f32.mrf.mxu0
      %v611 = vadd.f32 %v295, %v610
      %612 = vmatmul.f32.gmra.mxu0 %v401
      %v613 = vpop.f32.mrf.mxu0
      %v614 = vadd.f32 %v295, %v613
      %615 = vmatmul.f32.gmra.mxu0 %v404
      %v616 = vpop.f32.mrf.mxu0
      %v617 = vadd.f32 %v295, %v616
      %618 = vmatmul.f32.gmra.mxu0 %v407
      %v619 = vpop.f32.mrf.mxu0
      %v620 = vadd.f32 %v295, %v619
      %621 = vmatmul.f32.gmra.mxu0 %v410
      %v622 = vpop.f32.mrf.mxu0
      %v623 = vadd.f32 %v295, %v622
      %624 = vmatmul.f32.gmra.mxu0 %v413
      %v625 = vpop.f32.mrf.mxu0
      %v626 = vadd.f32 %v295, %v625
      %627 = vmatmul.f32.gmra.mxu0 %v416
      %v628 = vpop.f32.mrf.mxu0
      %v629 = vadd.f32 %v295, %v628
      %630 = vmatmul.f32.gmra.mxu0 %v419
      %v631 = vpop.f32.mrf.mxu0
      %v632 = vadd.f32 %v295, %v631
      %633 = vmatmul.f32.gmra.mxu0 %v422
      %v634 = vpop.f32.mrf.mxu0
      %v635 = vadd.f32 %v295, %v634
      %636 = vmatmul.f32.gmra.mxu0 %v425
      %v637 = vpop.f32.mrf.mxu0
      %v638 = vadd.f32 %v295, %v637
      %639 = vmatmul.f32.gmra.mxu0 %v428
      %v640 = vpop.f32.mrf.mxu0
      %v641 = vadd.f32 %v295, %v640
      %642 = vmatmul.f32.gmra.mxu0 %v431
      %v643 = vpop.f32.mrf.mxu0
      %v644 = vadd.f32 %v295, %v643
      %645 = vmatmul.f32.gmra.mxu0 %v434
      %v646 = vpop.f32.mrf.mxu0
      %v647 = vadd.f32 %v295, %v646
      %648 = vmatmul.f32.gmra.mxu0 %v437
      %v649 = vpop.f32.mrf.mxu0
      %v650 = vadd.f32 %v295, %v649
      %651 = vmatmul.f32.gmra.mxu0 %v440
      %v652 = vpop.f32.mrf.mxu0
      %v653 = vadd.f32 %v295, %v652
      %654 = vmatmul.f32.gmra.mxu0 %v443
      %v655 = vpop.f32.mrf.mxu0
      %v656 = vadd.f32 %v295, %v655
      %657 = vmatmul.f32.gmra.mxu0 %v446
      %v658 = vpop.f32.mrf.mxu0
      %v659 = vadd.f32 %v295, %v658
      %660 = vmatmul.f32.gmra.mxu0 %v449
      %v661 = vpop.f32.mrf.mxu0
      %v662 = vadd.f32 %v295, %v661
      %663 = vmatmul.f32.gmra.mxu0 %v452
      %v664 = vpop.f32.mrf.mxu0
      %v665 = vadd.f32 %v295, %v664
      %666 = vmatmul.f32.gmra.mxu0 %v455
      %v667 = vpop.f32.mrf.mxu0
      %v668 = vadd.f32 %v295, %v667
      %669 = vmatmul.f32.gmra.mxu0 %v458
      %v670 = vpop.f32.mrf.mxu0
      %v671 = vadd.f32 %v295, %v670
      %672 = vmatmul.f32.gmra.mxu0 %v461
      %v673 = vpop.f32.mrf.mxu0
      %v674 = vadd.f32 %v295, %v673
      %675 = vmatmul.f32.gmra.mxu0 %v464
      %v676 = vpop.f32.mrf.mxu0
      %v677 = vadd.f32 %v295, %v676
      %678 = vmatmul.f32.gmra.mxu0 %v467
      %v679 = vpop.f32.mrf.mxu0
      %v680 = vadd.f32 %v295, %v679
      %681 = vmatmul.f32.gmra.mxu0 %v470
      %v682 = vpop.f32.mrf.mxu0
      %v683 = vadd.f32 %v295, %v682
      %684 = vmatmul.f32.gmra.mxu0 %v473
      %v685 = vpop.f32.mrf.mxu0
      %v686 = vadd.f32 %v295, %v685
      %687 = vmatmul.f32.gmra.mxu0 %v476
      %v688 = vpop.f32.mrf.mxu0
      %v689 = vadd.f32 %v295, %v688
      %690 = vmatmul.f32.gmra.mxu0 %v479
      %v691 = vpop.f32.mrf.mxu0
      %v692 = vadd.f32 %v295, %v691
      %693 = vmatmul.f32.gmra.mxu0 %v482
      %v694 = vpop.f32.mrf.mxu0
      %v695 = vadd.f32 %v295, %v694
      %696 = vmatmul.f32.gmra.mxu0 %v485
      %v697 = vpop.f32.mrf.mxu0
      %v698 = vadd.f32 %v295, %v697
      %699 = vmatmul.f32.gmra.mxu0 %v488
      %v700 = vpop.f32.mrf.mxu0
      %v701 = vadd.f32 %v295, %v700
      %702 = vdwg.mxu0
      %v703 = vmax.f32 %v512, 0.0
      %v704 = vmax.f32 %v515, 0.0
      %v705 = vmax.f32 %v518, 0.0
      %v706 = vmax.f32 %v521, 0.0
      %v707 = vmax.f32 %v524, 0.0
      %v708 = vmax.f32 %v527, 0.0
      %v709 = vmax.f32 %v530, 0.0
      %v710 = vmax.f32 %v533, 0.0
      %v711 = vmax.f32 %v536, 0.0
      %v712 = vmax.f32 %v539, 0.0
      %v713 = vmax.f32 %v542, 0.0
      %v714 = vmax.f32 %v545, 0.0
      %v715 = vmax.f32 %v548, 0.0
      %v716 = vmax.f32 %v551, 0.0
      %v717 = vmax.f32 %v554, 0.0
      %v718 = vmax.f32 %v557, 0.0
      %v719 = vmax.f32 %v560, 0.0
      %v720 = vmax.f32 %v563, 0.0
      %v721 = vmax.f32 %v566, 0.0
      %v722 = vmax.f32 %v569, 0.0
      %v723 = vmax.f32 %v572, 0.0
      %v724 = vmax.f32 %v575, 0.0
      %v725 = vmax.f32 %v578, 0.0
      %v726 = vmax.f32 %v581, 0.0
      %v727 = vmax.f32 %v584, 0.0
      %v728 = vmax.f32 %v587, 0.0
      %v729 = vmax.f32 %v590, 0.0
      %v730 = vmax.f32 %v593, 0.0
      %v731 = vmax.f32 %v596, 0.0
      %v732 = vmax.f32 %v599, 0.0
      %v733 = vmax.f32 %v602, 0.0
      %v734 = vmax.f32 %v605, 0.0
      %v735 = vmax.f32 %v608, 0.0
      %v736 = vmax.f32 %v611, 0.0
      %v737 = vmax.f32 %v614, 0.0
      %v738 = vmax.f32 %v617, 0.0
      %v739 = vmax.f32 %v620, 0.0
      %v740 = vmax.f32 %v623, 0.0
      %v741 = vmax.f32 %v626, 0.0
      %v742 = vmax.f32 %v629, 0.0
      %v743 = vmax.f32 %v632, 0.0
      %v744 = vmax.f32 %v635, 0.0
      %v745 = vmax.f32 %v638, 0.0
      %v746 = vmax.f32 %v641, 0.0
      %v747 = vmax.f32 %v644, 0.0
      %v748 = vmax.f32 %v647, 0.0
      %v749 = vmax.f32 %v650, 0.0
      %v750 = vmax.f32 %v653, 0.0
      %v751 = vmax.f32 %v656, 0.0
      %v752 = vmax.f32 %v659, 0.0
      %v753 = vmax.f32 %v662, 0.0
      %v754 = vmax.f32 %v665, 0.0
      %v755 = vmax.f32 %v668, 0.0
      %v756 = vmax.f32 %v671, 0.0
      %v757 = vmax.f32 %v674, 0.0
      %v758 = vmax.f32 %v677, 0.0
      %v759 = vmax.f32 %v680, 0.0
      %v760 = vmax.f32 %v683, 0.0
      %v761 = vmax.f32 %v686, 0.0
      %v762 = vmax.f32 %v689, 0.0
      %v763 = vmax.f32 %v692, 0.0
      %v764 = vmax.f32 %v695, 0.0
      %v765 = vmax.f32 %v698, 0.0
      %v766 = vmax.f32 %v701, 0.0
      %v767 = vld [vmem:[%s3] sm:$0xff]
      %v768 = vld [vmem:[%s3 + $0x8] sm:$0xff]
      %v769 = vld [vmem:[%s3 + $0x10] sm:$0xff]
      %v770 = vld [vmem:[%s3 + $0x18] sm:$0xff]
      %v771 = vld [vmem:[%s3 + $0x20] sm:$0xff]
      %v772 = vld [vmem:[%s3 + $0x28] sm:$0xff]
      %v773 = vld [vmem:[%s3 + $0x30] sm:$0xff]
      %v774 = vld [vmem:[%s3 + $0x38] sm:$0xff]
      %v775 = vld [vmem:[%s3 + $0x40] sm:$0xff]
      %v776 = vld [vmem:[%s3 + $0x48] sm:$0xff]
      %v777 = vld [vmem:[%s3 + $0x50] sm:$0xff]
      %v778 = vld [vmem:[%s3 + $0x58] sm:$0xff]
      %v779 = vld [vmem:[%s3 + $0x60] sm:$0xff]
      %v780 = vld [vmem:[%s3 + $0x68] sm:$0xff]
      %v781 = vld [vmem:[%s3 + $0x70] sm:$0xff]
      %v782 = vld [vmem:[%s3 + $0x78] sm:$0xff]
      %v783 = vld [vmem:[%s4] sm:$0x1]
      %v785 = vperm.slane %v783, 0
      %787 = vmatpush.msra.mxu0 %v782
      %788 = vmatpush.msra.mxu0 %v781
      %789 = vmatpush.msra.mxu0 %v780
      %790 = vmatpush.msra.mxu0 %v779
      %791 = vmatpush.msra.mxu0 %v778
      %792 = vmatpush.msra.mxu0 %v777
      %793 = vmatpush.msra.mxu0 %v776
      %794 = vmatpush.msra.mxu0 %v775
      %795 = vmatpush.msra.mxu0 %v774
      %796 = vmatpush.msra.mxu0 %v773
      %797 = vmatpush.msra.mxu0 %v772
      %798 = vmatpush.msra.mxu0 %v771
      %799 = vmatpush.msra.mxu0 %v770
      %800 = vmatpush.msra.mxu0 %v769
      %801 = vmatpush.msra.mxu0 %v768
      %802 = vmatpush.msra.mxu0 %v767
      %803 = vmatmul.f32.gmra.mxu0 %v703
      %v804 = vpop.f32.mrf.mxu0
      %v805 = vadd.f32 %v785, %v804
      %806 = vmatmul.f32.gmra.mxu0 %v704
      %v807 = vpop.f32.mrf.mxu0
      %v808 = vadd.f32 %v785, %v807
      %809 = vmatmul.f32.gmra.mxu0 %v705
      %v810 = vpop.f32.mrf.mxu0
      %v811 = vadd.f32 %v785, %v810
      %812 = vmatmul.f32.gmra.mxu0 %v706
      %v813 = vpop.f32.mrf.mxu0
      %v814 = vadd.f32 %v785, %v813
      %815 = vmatmul.f32.gmra.mxu0 %v707
      %v816 = vpop.f32.mrf.mxu0
      %v817 = vadd.f32 %v785, %v816
      %818 = vmatmul.f32.gmra.mxu0 %v708
      %v819 = vpop.f32.mrf.mxu0
      %v820 = vadd.f32 %v785, %v819
      %821 = vmatmul.f32.gmra.mxu0 %v709
      %v822 = vpop.f32.mrf.mxu0
      %v823 = vadd.f32 %v785, %v822
      %824 = vmatmul.f32.gmra.mxu0 %v710
      %v825 = vpop.f32.mrf.mxu0
      %v826 = vadd.f32 %v785, %v825
      %827 = vmatmul.f32.gmra.mxu0 %v711
      %v828 = vpop.f32.mrf.mxu0
      %v829 = vadd.f32 %v785, %v828
      %830 = vmatmul.f32.gmra.mxu0 %v712
      %v831 = vpop.f32.mrf.mxu0
      %v832 = vadd.f32 %v785, %v831
      %833 = vmatmul.f32.gmra.mxu0 %v713
      %v834 = vpop.f32.mrf.mxu0
      %v835 = vadd.f32 %v785, %v834
      %836 = vmatmul.f32.gmra.mxu0 %v714
      %v837 = vpop.f32.mrf.mxu0
      %v838 = vadd.f32 %v785, %v837
      %839 = vmatmul.f32.gmra.mxu0 %v715
      %v840 = vpop.f32.mrf.mxu0
      %v841 = vadd.f32 %v785, %v840
      %842 = vmatmul.f32.gmra.mxu0 %v716
      %v843 = vpop.f32.mrf.mxu0
      %v844 = vadd.f32 %v785, %v843
      %845 = vmatmul.f32.gmra.mxu0 %v717
      %v846 = vpop.f32.mrf.mxu0
      %v847 = vadd.f32 %v785, %v846
      %848 = vmatmul.f32.gmra.mxu0 %v718
      %v849 = vpop.f32.mrf.mxu0
      %v850 = vadd.f32 %v785, %v849
      %851 = vmatmul.f32.gmra.mxu0 %v719
      %v852 = vpop.f32.mrf.mxu0
      %v853 = vadd.f32 %v785, %v852
      %854 = vmatmul.f32.gmra.mxu0 %v720
      %v855 = vpop.f32.mrf.mxu0
      %v856 = vadd.f32 %v785, %v855
      %857 = vmatmul.f32.gmra.mxu0 %v721
      %v858 = vpop.f32.mrf.mxu0
      %v859 = vadd.f32 %v785, %v858
      %860 = vmatmul.f32.gmra.mxu0 %v722
      %v861 = vpop.f32.mrf.mxu0
      %v862 = vadd.f32 %v785, %v861
      %863 = vmatmul.f32.gmra.mxu0 %v723
      %v864 = vpop.f32.mrf.mxu0
      %v865 = vadd.f32 %v785, %v864
      %866 = vmatmul.f32.gmra.mxu0 %v724
      %v867 = vpop.f32.mrf.mxu0
      %v868 = vadd.f32 %v785, %v867
      %869 = vmatmul.f32.gmra.mxu0 %v725
      %v870 = vpop.f32.mrf.mxu0
      %v871 = vadd.f32 %v785, %v870
      %872 = vmatmul.f32.gmra.mxu0 %v726
      %v873 = vpop.f32.mrf.mxu0
      %v874 = vadd.f32 %v785, %v873
      %875 = vmatmul.f32.gmra.mxu0 %v727
      %v876 = vpop.f32.mrf.mxu0
      %v877 = vadd.f32 %v785, %v876
      %878 = vmatmul.f32.gmra.mxu0 %v728
      %v879 = vpop.f32.mrf.mxu0
      %v880 = vadd.f32 %v785, %v879
      %881 = vmatmul.f32.gmra.mxu0 %v729
      %v882 = vpop.f32.mrf.mxu0
      %v883 = vadd.f32 %v785, %v882
      %884 = vmatmul.f32.gmra.mxu0 %v730
      %v885 = vpop.f32.mrf.mxu0
      %v886 = vadd.f32 %v785, %v885
      %887 = vmatmul.f32.gmra.mxu0 %v731
      %v888 = vpop.f32.mrf.mxu0
      %v889 = vadd.f32 %v785, %v888
      %890 = vmatmul.f32.gmra.mxu0 %v732
      %v891 = vpop.f32.mrf.mxu0
      %v892 = vadd.f32 %v785, %v891
      %893 = vmatmul.f32.gmra.mxu0 %v733
      %v894 = vpop.f32.mrf.mxu0
      %v895 = vadd.f32 %v785, %v894
      %896 = vmatmul.f32.gmra.mxu0 %v734
      %v897 = vpop.f32.mrf.mxu0
      %v898 = vadd.f32 %v785, %v897
      %899 = vmatmul.f32.gmra.mxu0 %v735
      %v900 = vpop.f32.mrf.mxu0
      %v901 = vadd.f32 %v785, %v900
      %902 = vmatmul.f32.gmra.mxu0 %v736
      %v903 = vpop.f32.mrf.mxu0
      %v904 = vadd.f32 %v785, %v903
      %905 = vmatmul.f32.gmra.mxu0 %v737
      %v906 = vpop.f32.mrf.mxu0
      %v907 = vadd.f32 %v785, %v906
      %908 = vmatmul.f32.gmra.mxu0 %v738
      %v909 = vpop.f32.mrf.mxu0
      %v910 = vadd.f32 %v785, %v909
      %911 = vmatmul.f32.gmra.mxu0 %v739
      %v912 = vpop.f32.mrf.mxu0
      %v913 = vadd.f32 %v785, %v912
      %914 = vmatmul.f32.gmra.mxu0 %v740
      %v915 = vpop.f32.mrf.mxu0
      %v916 = vadd.f32 %v785, %v915
      %917 = vmatmul.f32.gmra.mxu0 %v741
      %v918 = vpop.f32.mrf.mxu0
      %v919 = vadd.f32 %v785, %v918
      %920 = vmatmul.f32.gmra.mxu0 %v742
      %v921 = vpop.f32.mrf.mxu0
      %v922 = vadd.f32 %v785, %v921
      %923 = vmatmul.f32.gmra.mxu0 %v743
      %v924 = vpop.f32.mrf.mxu0
      %v925 = vadd.f32 %v785, %v924
      %926 = vmatmul.f32.gmra.mxu0 %v744
      %v927 = vpop.f32.mrf.mxu0
      %v928 = vadd.f32 %v785, %v927
      %929 = vmatmul.f32.gmra.mxu0 %v745
      %v930 = vpop.f32.mrf.mxu0
      %v931 = vadd.f32 %v785, %v930
      %932 = vmatmul.f32.gmra.mxu0 %v746
      %v933 = vpop.f32.mrf.mxu0
      %v934 = vadd.f32 %v785, %v933
      %935 = vmatmul.f32.gmra.mxu0 %v747
      %v936 = vpop.f32.mrf.mxu0
      %v937 = vadd.f32 %v785, %v936
      %938 = vmatmul.f32.gmra.mxu0 %v748
      %v939 = vpop.f32.mrf.mxu0
      %v940 = vadd.f32 %v785, %v939
      %941 = vmatmul.f32.gmra.mxu0 %v749
      %v942 = vpop.f32.mrf.mxu0
      %v943 = vadd.f32 %v785, %v942
      %944 = vmatmul.f32.gmra.mxu0 %v750
      %v945 = vpop.f32.mrf.mxu0
      %v946 = vadd.f32 %v785, %v945
      %947 = vmatmul.f32.gmra.mxu0 %v751
      %v948 = vpop.f32.mrf.mxu0
      %v949 = vadd.f32 %v785, %v948
      %950 = vmatmul.f32.gmra.mxu0 %v752
      %v951 = vpop.f32.mrf.mxu0
      %v952 = vadd.f32 %v785, %v951
      %953 = vmatmul.f32.gmra.mxu0 %v753
      %v954 = vpop.f32.mrf.mxu0
      %v955 = vadd.f32 %v785, %v954
      %956 = vmatmul.f32.gmra.mxu0 %v754
      %v957 = vpop.f32.mrf.mxu0
      %v958 = vadd.f32 %v785, %v957
      %959 = vmatmul.f32.gmra.mxu0 %v755
      %v960 = vpop.f32.mrf.mxu0
      %v961 = vadd.f32 %v785, %v960
      %962 = vmatmul.f32.gmra.mxu0 %v756
      %v963 = vpop.f32.mrf.mxu0
      %v964 = vadd.f32 %v785, %v963
      %965 = vmatmul.f32.gmra.mxu0 %v757
      %v966 = vpop.f32.mrf.mxu0
      %v967 = vadd.f32 %v785, %v966
      %968 = vmatmul.f32.gmra.mxu0 %v758
      %v969 = vpop.f32.mrf.mxu0
      %v970 = vadd.f32 %v785, %v969
      %971 = vmatmul.f32.gmra.mxu0 %v759
      %v972 = vpop.f32.mrf.mxu0
      %v973 = vadd.f32 %v785, %v972
      %974 = vmatmul.f32.gmra.mxu0 %v760
      %v975 = vpop.f32.mrf.mxu0
      %v976 = vadd.f32 %v785, %v975
      %977 = vmatmul.f32.gmra.mxu0 %v761
      %v978 = vpop.f32.mrf.mxu0
      %v979 = vadd.f32 %v785, %v978
      %980 = vmatmul.f32.gmra.mxu0 %v762
      %v981 = vpop.f32.mrf.mxu0
      %v982 = vadd.f32 %v785, %v981
      %983 = vmatmul.f32.gmra.mxu0 %v763
      %v984 = vpop.f32.mrf.mxu0
      %v985 = vadd.f32 %v785, %v984
      %986 = vmatmul.f32.gmra.mxu0 %v764
      %v987 = vpop.f32.mrf.mxu0
      %v988 = vadd.f32 %v785, %v987
      %989 = vmatmul.f32.gmra.mxu0 %v765
      %v990 = vpop.f32.mrf.mxu0
      %v991 = vadd.f32 %v785, %v990
      %992 = vmatmul.f32.gmra.mxu0 %v766
      %v993 = vpop.f32.mrf.mxu0
      %v994 = vadd.f32 %v785, %v993
      %995 = vdwg.mxu0
      %vm996 = vcmask 64512
      %997 = vst.msk [vmem:[%s226] sm:$0xff] %vm996, %v805
      %998 = vst.msk [vmem:[%s226 + $0x8] sm:$0xff] %vm996, %v808
      %999 = vst.msk [vmem:[%s226 + $0x10] sm:$0xff] %vm996, %v811
      %1000 = vst.msk [vmem:[%s226 + $0x18] sm:$0xff] %vm996, %v814
      %1001 = vst.msk [vmem:[%s226 + $0x20] sm:$0xff] %vm996, %v817
      %1002 = vst.msk [vmem:[%s226 + $0x28] sm:$0xff] %vm996, %v820
      %1003 = vst.msk [vmem:[%s226 + $0x30] sm:$0xff] %vm996, %v823
      %1004 = vst.msk [vmem:[%s226 + $0x38] sm:$0xff] %vm996, %v826
      %1005 = vst.msk [vmem:[%s226 + $0x40] sm:$0xff] %vm996, %v829
      %1006 = vst.msk [vmem:[%s226 + $0x48] sm:$0xff] %vm996, %v832
      %1007 = vst.msk [vmem:[%s226 + $0x50] sm:$0xff] %vm996, %v835
      %1008 = vst.msk [vmem:[%s226 + $0x58] sm:$0xff] %vm996, %v838
      %1009 = vst.msk [vmem:[%s226 + $0x60] sm:$0xff] %vm996, %v841
      %1010 = vst.msk [vmem:[%s226 + $0x68] sm:$0xff] %vm996, %v844
      %1011 = vst.msk [vmem:[%s226 + $0x70] sm:$0xff] %vm996, %v847
      %1012 = vst.msk [vmem:[%s226 + $0x78] sm:$0xff] %vm996, %v850
      %1013 = vst.msk [vmem:[%s226 + $0x80] sm:$0xff] %vm996, %v853
      %1014 = vst.msk [vmem:[%s226 + $0x88] sm:$0xff] %vm996, %v856
      %1015 = vst.msk [vmem:[%s226 + $0x90] sm:$0xff] %vm996, %v859
      %1016 = vst.msk [vmem:[%s226 + $0x98] sm:$0xff] %vm996, %v862
      %1017 = vst.msk [vmem:[%s226 + $0xa0] sm:$0xff] %vm996, %v865
      %1018 = vst.msk [vmem:[%s226 + $0xa8] sm:$0xff] %vm996, %v868
      %1019 = vst.msk [vmem:[%s226 + $0xb0] sm:$0xff] %vm996, %v871
      %1020 = vst.msk [vmem:[%s226 + $0xb8] sm:$0xff] %vm996, %v874
      %1021 = vst.msk [vmem:[%s226 + $0xc0] sm:$0xff] %vm996, %v877
      %1022 = vst.msk [vmem:[%s226 + $0xc8] sm:$0xff] %vm996, %v880
      %1023 = vst.msk [vmem:[%s226 + $0xd0] sm:$0xff] %vm996, %v883
      %1024 = vst.msk [vmem:[%s226 + $0xd8] sm:$0xff] %vm996, %v886
      %1025 = vst.msk [vmem:[%s226 + $0xe0] sm:$0xff] %vm996, %v889
      %1026 = vst.msk [vmem:[%s226 + $0xe8] sm:$0xff] %vm996, %v892
      %1027 = vst.msk [vmem:[%s226 + $0xf0] sm:$0xff] %vm996, %v895
      %1028 = vst.msk [vmem:[%s226 + $0xf8] sm:$0xff] %vm996, %v898
      %1029 = vst.msk [vmem:[%s226 + $0x100] sm:$0xff] %vm996, %v901
      %1030 = vst.msk [vmem:[%s226 + $0x108] sm:$0xff] %vm996, %v904
      %1031 = vst.msk [vmem:[%s226 + $0x110] sm:$0xff] %vm996, %v907
      %1032 = vst.msk [vmem:[%s226 + $0x118] sm:$0xff] %vm996, %v910
      %1033 = vst.msk [vmem:[%s226 + $0x120] sm:$0xff] %vm996, %v913
      %1034 = vst.msk [vmem:[%s226 + $0x128] sm:$0xff] %vm996, %v916
      %1035 = vst.msk [vmem:[%s226 + $0x130] sm:$0xff] %vm996, %v919
      %1036 = vst.msk [vmem:[%s226 + $0x138] sm:$0xff] %vm996, %v922
      %1037 = vst.msk [vmem:[%s226 + $0x140] sm:$0xff] %vm996, %v925
      %1038 = vst.msk [vmem:[%s226 + $0x148] sm:$0xff] %vm996, %v928
      %1039 = vst.msk [vmem:[%s226 + $0x150] sm:$0xff] %vm996, %v931
      %1040 = vst.msk [vmem:[%s226 + $0x158] sm:$0xff] %vm996, %v934
      %1041 = vst.msk [vmem:[%s226 + $0x160] sm:$0xff] %vm996, %v937
      %1042 = vst.msk [vmem:[%s226 + $0x168] sm:$0xff] %vm996, %v940
      %1043 = vst.msk [vmem:[%s226 + $0x170] sm:$0xff] %vm996, %v943
      %1044 = vst.msk [vmem:[%s226 + $0x178] sm:$0xff] %vm996, %v946
      %1045 = vst.msk [vmem:[%s226 + $0x180] sm:$0xff] %vm996, %v949
      %1046 = vst.msk [vmem:[%s226 + $0x188] sm:$0xff] %vm996, %v952
      %1047 = vst.msk [vmem:[%s226 + $0x190] sm:$0xff] %vm996, %v955
      %1048 = vst.msk [vmem:[%s226 + $0x198] sm:$0xff] %vm996, %v958
      %1049 = vst.msk [vmem:[%s226 + $0x1a0] sm:$0xff] %vm996, %v961
      %1050 = vst.msk [vmem:[%s226 + $0x1a8] sm:$0xff] %vm996, %v964
      %1051 = vst.msk [vmem:[%s226 + $0x1b0] sm:$0xff] %vm996, %v967
      %1052 = vst.msk [vmem:[%s226 + $0x1b8] sm:$0xff] %vm996, %v970
      %1053 = vst.msk [vmem:[%s226 + $0x1c0] sm:$0xff] %vm996, %v973
      %1054 = vst.msk [vmem:[%s226 + $0x1c8] sm:$0xff] %vm996, %v976
      %1055 = vst.msk [vmem:[%s226 + $0x1d0] sm:$0xff] %vm996, %v979
      %1056 = vst.msk [vmem:[%s226 + $0x1d8] sm:$0xff] %vm996, %v982
      %1057 = vst.msk [vmem:[%s226 + $0x1e0] sm:$0xff] %vm996, %v985
      %1058 = vst.msk [vmem:[%s226 + $0x1e8] sm:$0xff] %vm996, %v988
      %1059 = vst.msk [vmem:[%s226 + $0x1f0] sm:$0xff] %vm996, %v991
      %1060 = vst.msk [vmem:[%s226 + $0x1f8] sm:$0xff] %vm996, %v994
      %s1061 = smul.u32 64, %s16
      %p1062 = scmp.lt.s32.totalorder %s1061, 255
      %s1063 = scalar_select %p1062, %s1061, 255
      %s1064 = smul.addr %s1063, 8
      %s1065 = scalar_lea.vmem %s5, %s1064
      // Predicated region
      $region41: #{cls_net_forward.1} parent=39 // pred_check
        %p1066 = pneg %p144
      $region42: #{cls_net_forward.1} parent=39 // pred_check_branch
        %1068 = sbr.rel (%p1066) target = $region44
      $region43: #{cls_net_forward.1} parent=39 // pred_region
        %s1069 = smul.u32 64, %s16
      $region44: #{cls_net_forward.1} parent=39 // pred_fallthru
        _
    $region40: #{cls_net_forward.1} parent=5 // pred_fallthru
      _
    %p1070 = scmp.le.s32.totalorder 2, %s11
    // Predicated region
    $region45: #{cls_net_forward.1} parent=5 // pred_check
      %p1071 = pneg %p1070
    $region46: #{cls_net_forward.1} parent=5 // pred_check_branch
      %1073 = sbr.rel (%p1071) target = $region48
    $region47: #{cls_net_forward.1} parent=5 // pred_region
      %s1074 = ssub.s32 %s11, 2
      // Predicated region
      $region49: #{cls_net_forward.1} parent=47 // pred_check
        %p1075 = pneg %p150
      $region50: #{cls_net_forward.1} parent=47 // pred_check_branch
        %1077 = sbr.rel (%p1075) target = $region52
      $region51: #{cls_net_forward.1} parent=47 // pred_region
        %s1078 = smul.u32 64, %s17
        %p1079 = scmp.lt.s32.totalorder %s1078, 255
        %s1080 = scalar_select %p1079, %s1078, 255
        %s1081 = smul.addr %s1080, 8
        %s1082 = scalar_lea.vmem %s5, %s1081
      $region52: #{cls_net_forward.1} parent=47 // pred_fallthru
        _
    $region48: #{cls_net_forward.1} parent=5 // pred_fallthru
      _
  $region6: #{cls_net_forward.1} parent=0 // loop_footer
    %s15 = sadd.s32 1, %s11
  $region7: #{cls_net_forward.1} parent=0 // loop_footer_branch
    %10 = sbr.rel target = $region3
  $region8: #{cls_net_forward.1} parent=0 // loop_exit
    _

</llo_original>
